<compile_context>
chip_gen: v7x
topology: tpu7x:2x2x1
jax: 0.10.0
libtpu: 0.0.40
codegen_flags: <defaults>
</compile_context>

<pallas_src>
import functools

import jax
import jax.numpy as jnp
from jax.experimental import pallas as pl
from jax.experimental.pallas import tpu as pltpu


def _round_up(x, m):
    return ((x + m - 1) // m) * m


# --------------------------------------------------------------------------- #
# Kernel
# --------------------------------------------------------------------------- #
def _maxout_kernel(x_ref, w_ref, b_ref, o_ref, *, num_units):
    # Grid: (i: B tile, j: F_out tile)
    #   x_ref: (TILE_M, F_in_pad)            block (i, 0) of x
    #   w_ref: (num_units, F_in_pad, TILE_N) block (0, 0, j) of packed weight
    #   b_ref: (num_units, 1, TILE_N)        block (0, 0, j) of packed bias
    #   o_ref: (TILE_M, TILE_N)              output block (i, j)
    x = x_ref[...]
    mx = jnp.dot(x, w_ref[0], preferred_element_type=jnp.float32) + b_ref[0]
    for u in range(1, num_units):  # static unroll -> MXU fed back-to-back
        mx = jnp.maximum(
            mx,
            jnp.dot(x, w_ref[u], preferred_element_type=jnp.float32) + b_ref[u])
    o_ref[...] = mx.astype(o_ref.dtype)


# --------------------------------------------------------------------------- #
# One-time parameter packing (hoisted out of the per-call path)
# --------------------------------------------------------------------------- #
def pack_maxout_params(w_torch, b_torch, *, num_units):
    """torch layout: w (F_out*K, F_in), b (F_out*K,) with column c = j*K + u.
    Returns unit-major, 128-padded (K, F_in_pad, F_out_pad) / (K, 1, F_out_pad)."""
    total_out, F_in = w_torch.shape
    F_out = total_out // num_units
    F_in_pad = _round_up(F_in, 128)
    F_out_pad = _round_up(F_out, 128)

    w = w_torch.T.reshape(F_in, F_out, num_units).transpose(2, 0, 1)
    w = jnp.pad(w, ((0, 0), (0, F_in_pad - F_in), (0, F_out_pad - F_out)))
    b = b_torch.reshape(F_out, num_units).T.reshape(num_units, 1, F_out)
    b = jnp.pad(b, ((0, 0), (0, 0), (0, F_out_pad - F_out)))
    return w, b


# --------------------------------------------------------------------------- #
# Tile selection (budgeted against VMEM; works for v5e/v6e/v7x)
# --------------------------------------------------------------------------- #
def _choose_tiles(B, F_in_pad, F_out_pad, num_units, itemsize,
                  vmem_budget_bytes=48 * 1024 * 1024):
    # Largest lane-dense N tile that divides F_out_pad.
    tile_n = 128
    for cand in (512, 384, 256, 128):
        if F_out_pad % cand == 0:
            tile_n = cand
            break
    # Give v7x's 2nd TensorCore >= 2 parallel j-blocks when F_out permits.
    if F_out_pad // tile_n < 2 and F_out_pad >= 256 and (F_out_pad // 2) % 128 == 0:
        tile_n = F_out_pad // 2

    tile_m = min(1024, _round_up(B, 8))

    def footprint(tm, tn):
        # double-buffered x / w / b / out blocks
        return 2 * itemsize * (tm * F_in_pad
                               + num_units * F_in_pad * tn
                               + num_units * tn
                               + tm * tn)

    while footprint(tile_m, tile_n) > vmem_budget_bytes and tile_m > 8:
        tile_m = max(8, tile_m // 2)
    if footprint(tile_m, tile_n) > vmem_budget_bytes:
        for cand in (256, 128):
            if cand < tile_n and F_out_pad % cand == 0:
                tile_n = cand
                if footprint(tile_m, tile_n) <= vmem_budget_bytes:
                    break
    # TODO(synk): if F_in_pad alone overflows the VMEM budget (very large
    # input_features), fall back to a K-tiled grid with an f32 accumulator.
    return tile_m, tile_n, footprint(tile_m, tile_n)


# --------------------------------------------------------------------------- #
# Wrapper
# --------------------------------------------------------------------------- #
def maxout_pallas(x, w_packed, b_packed, *, out_features):
    """x: (B, F_in) f32; w_packed/b_packed from pack_maxout_params().
    Returns (B, out_features)."""
    B, F_in = x.shape
    num_units, F_in_pad, F_out_pad = w_packed.shape
    itemsize = jnp.dtype(x.dtype).itemsize

    TILE_M, TILE_N, vmem_footprint = _choose_tiles(
        B, F_in_pad, F_out_pad, num_units, itemsize)

    B_pad = _round_up(B, TILE_M)
    x_p = jnp.pad(x, ((0, B_pad - B), (0, F_in_pad - F_in)))

    grid = (B_pad // TILE_M, F_out_pad // TILE_N)
    n_i = grid[0]

    cost = pl.CostEstimate(
        flops=2 * B_pad * F_in_pad * num_units * F_out_pad,
        transcendentals=0,
        bytes_accessed=(B_pad * F_in_pad                 # x: fetched once per i, reused over j
                        + n_i * w_packed.size            # weights re-streamed per i tile
                        + n_i * b_packed.size
                        + B_pad * F_out_pad) * itemsize,
    )

    vmem_limit = int(min(56 * 1024 * 1024,
                         max(32 * 1024 * 1024, vmem_footprint + 8 * 1024 * 1024)))

    out_padded = pl.pallas_call(
        functools.partial(_maxout_kernel, num_units=num_units),
        out_shape=jax.ShapeDtypeStruct((B_pad, F_out_pad), x.dtype),
        grid=grid,
        in_specs=[
            pl.BlockSpec((TILE_M, F_in_pad), lambda i, j: (i, 0)),
            pl.BlockSpec((num_units, F_in_pad, TILE_N), lambda i, j: (0, 0, j)),
            pl.BlockSpec((num_units, 1, TILE_N), lambda i, j: (0, 0, j)),
        ],
        out_specs=pl.BlockSpec((TILE_M, TILE_N), lambda i, j: (i, j)),
        compiler_params=pltpu.CompilerParams(
            dimension_semantics=("parallel", "parallel"),
            vmem_limit_bytes=vmem_limit,
        ),
        cost_estimate=cost,
    )(x_p, w_packed, b_packed)

    return out_padded[:B, :out_features]


def maxout_reference(x, w_torch, b_torch, *, num_units):
    # Pure-JAX replica of the PyTorch forward (weight in torch layout (out*K, in)).
    out = x @ w_torch.T + b_torch                   # (B, F_out*K)
    out = out.reshape(x.shape[0], -1, num_units)    # (B, F_out, K)
    return jnp.max(out, axis=2)                     # (B, F_out)


if __name__ == "__main__":
    B = 8
    input_features = 32
    output_features = 16
    num_units = 4

    key = jax.random.PRNGKey(0)
    kx, kw, kb = jax.random.split(key, 3)

    # Deterministic "nn.Linear"-style params: weight (out*K, in), bias (out*K,)
    bound = 1.0 / (input_features ** 0.5)
    w_torch = jax.random.uniform(
        kw, (output_features * num_units, input_features),
        minval=-bound, maxval=bound, dtype=jnp.float32)
    b_torch = jax.random.uniform(
        kb, (output_features * num_units,),
        minval=-bound, maxval=bound, dtype=jnp.float32)
    x = jax.random.normal(kx, (B, input_features), dtype=jnp.float32)

    # Pack parameters once (outside the per-call path).
    w_packed, b_packed = pack_maxout_params(w_torch, b_torch, num_units=num_units)

    fn = jax.jit(functools.partial(maxout_pallas, out_features=output_features))
    out = jax.block_until_ready(fn(x, w_packed, b_packed))

    ref = maxout_reference(x, w_torch, b_torch, num_units=num_units)
    assert out.shape == (B, output_features)
    max_err = float(jnp.max(jnp.abs(out - ref)))
    assert jnp.allclose(out, ref, atol=1e-5, rtol=1e-5), f"max abs err = {max_err}"

    print("KERNEL_OK")
</pallas_src>

<mosaic_0001>
module attributes {stable_mosaic.version = 11 : i64} {
  func.func @_maxout_kernel(%arg0: i32, %arg1: i32, %arg2: memref<8x128xf32, #tpu.memory_space<vmem>>, %arg3: memref<4x128x128xf32, #tpu.memory_space<vmem>>, %arg4: memref<4x1x128xf32, #tpu.memory_space<vmem>>, %arg5: memref<8x128xf32, #tpu.memory_space<vmem>>) attributes {dimension_semantics = [#tpu.dimension_semantics<parallel>, #tpu.dimension_semantics<parallel>], iteration_bounds = array<i64: 1, 1>, scalar_prefetch = 0 : i64, scratch_operands = 0 : i64, tpu.core_type = #tpu.core_type<tc>, window_params = [{transform_indices = @transform_0, window_bounds = array<i64: 8, 128>}, {transform_indices = @transform_1, window_bounds = array<i64: 4, 128, 128>}, {transform_indices = @transform_2, window_bounds = array<i64: 4, 1, 128>}, {transform_indices = @transform_3, window_bounds = array<i64: 8, 128>}]} {
    %c0 = arith.constant 0 : index
    %c0_0 = arith.constant 0 : index
    %0 = vector.load %arg2[%c0, %c0_0] : memref<8x128xf32, #tpu.memory_space<vmem>>, vector<8x128xf32>
    %c0_1 = arith.constant 0 : index
    %c0_2 = arith.constant 0 : index
    %c0_3 = arith.constant 0 : index
    %1 = vector.load %arg3[%c0_1, %c0_2, %c0_3] : memref<4x128x128xf32, #tpu.memory_space<vmem>>, vector<1x128x128xf32>
    %2 = vector.shape_cast %1 : vector<1x128x128xf32> to vector<128x128xf32>
    %cst = arith.constant dense<0.000000e+00> : vector<8x128xf32>
    %3 = tpu.matmul %0, %2, %cst {dimension_numbers = #tpu.dot_dimension_numbers<[1], [0], [0], [1], [0, 0, 1, 1], [], []>} : vector<8x128xf32>, vector<128x128xf32>, vector<8x128xf32> -> vector<8x128xf32>
    %c0_4 = arith.constant 0 : index
    %c0_5 = arith.constant 0 : index
    %c0_6 = arith.constant 0 : index
    %4 = vector.load %arg4[%c0_4, %c0_5, %c0_6] : memref<4x1x128xf32, #tpu.memory_space<vmem>>, vector<1x1x128xf32>
    %5 = vector.shape_cast %4 : vector<1x1x128xf32> to vector<1x128xf32>
    %6 = vector.broadcast %5 : vector<1x128xf32> to vector<8x128xf32>
    %7 = arith.addf %3, %6 : vector<8x128xf32>
    %c1 = arith.constant 1 : index
    %c0_7 = arith.constant 0 : index
    %c0_8 = arith.constant 0 : index
    %8 = vector.load %arg3[%c1, %c0_7, %c0_8] : memref<4x128x128xf32, #tpu.memory_space<vmem>>, vector<1x128x128xf32>
    %9 = vector.shape_cast %8 : vector<1x128x128xf32> to vector<128x128xf32>
    %cst_9 = arith.constant dense<0.000000e+00> : vector<8x128xf32>
    %10 = tpu.matmul %0, %9, %cst_9 {dimension_numbers = #tpu.dot_dimension_numbers<[1], [0], [0], [1], [0, 0, 1, 1], [], []>} : vector<8x128xf32>, vector<128x128xf32>, vector<8x128xf32> -> vector<8x128xf32>
    %c1_10 = arith.constant 1 : index
    %c0_11 = arith.constant 0 : index
    %c0_12 = arith.constant 0 : index
    %11 = vector.load %arg4[%c1_10, %c0_11, %c0_12] : memref<4x1x128xf32, #tpu.memory_space<vmem>>, vector<1x1x128xf32>
    %12 = vector.shape_cast %11 : vector<1x1x128xf32> to vector<1x128xf32>
    %13 = vector.broadcast %12 : vector<1x128xf32> to vector<8x128xf32>
    %14 = arith.addf %10, %13 : vector<8x128xf32>
    %15 = arith.maximumf %7, %14 : vector<8x128xf32>
    %c2 = arith.constant 2 : index
    %c0_13 = arith.constant 0 : index
    %c0_14 = arith.constant 0 : index
    %16 = vector.load %arg3[%c2, %c0_13, %c0_14] : memref<4x128x128xf32, #tpu.memory_space<vmem>>, vector<1x128x128xf32>
    %17 = vector.shape_cast %16 : vector<1x128x128xf32> to vector<128x128xf32>
    %cst_15 = arith.constant dense<0.000000e+00> : vector<8x128xf32>
    %18 = tpu.matmul %0, %17, %cst_15 {dimension_numbers = #tpu.dot_dimension_numbers<[1], [0], [0], [1], [0, 0, 1, 1], [], []>} : vector<8x128xf32>, vector<128x128xf32>, vector<8x128xf32> -> vector<8x128xf32>
    %c2_16 = arith.constant 2 : index
    %c0_17 = arith.constant 0 : index
    %c0_18 = arith.constant 0 : index
    %19 = vector.load %arg4[%c2_16, %c0_17, %c0_18] : memref<4x1x128xf32, #tpu.memory_space<vmem>>, vector<1x1x128xf32>
    %20 = vector.shape_cast %19 : vector<1x1x128xf32> to vector<1x128xf32>
    %21 = vector.broadcast %20 : vector<1x128xf32> to vector<8x128xf32>
    %22 = arith.addf %18, %21 : vector<8x128xf32>
    %23 = arith.maximumf %15, %22 : vector<8x128xf32>
    %c3 = arith.constant 3 : index
    %c0_19 = arith.constant 0 : index
    %c0_20 = arith.constant 0 : index
    %24 = vector.load %arg3[%c3, %c0_19, %c0_20] : memref<4x128x128xf32, #tpu.memory_space<vmem>>, vector<1x128x128xf32>
    %25 = vector.shape_cast %24 : vector<1x128x128xf32> to vector<128x128xf32>
    %cst_21 = arith.constant dense<0.000000e+00> : vector<8x128xf32>
    %26 = tpu.matmul %0, %25, %cst_21 {dimension_numbers = #tpu.dot_dimension_numbers<[1], [0], [0], [1], [0, 0, 1, 1], [], []>} : vector<8x128xf32>, vector<128x128xf32>, vector<8x128xf32> -> vector<8x128xf32>
    %c3_22 = arith.constant 3 : index
    %c0_23 = arith.constant 0 : index
    %c0_24 = arith.constant 0 : index
    %27 = vector.load %arg4[%c3_22, %c0_23, %c0_24] : memref<4x1x128xf32, #tpu.memory_space<vmem>>, vector<1x1x128xf32>
    %28 = vector.shape_cast %27 : vector<1x1x128xf32> to vector<1x128xf32>
    %29 = vector.broadcast %28 : vector<1x128xf32> to vector<8x128xf32>
    %30 = arith.addf %26, %29 : vector<8x128xf32>
    %31 = arith.maximumf %23, %30 : vector<8x128xf32>
    %c0_25 = arith.constant 0 : index
    %c0_26 = arith.constant 0 : index
    %32 = vector.load %arg5[%c0_25, %c0_26] : memref<8x128xf32, #tpu.memory_space<vmem>>, vector<8x128xf32>
    tpu.vector_store %arg5[%c0_25, %c0_26], %31 {strides = array<i32>} : memref<8x128xf32, #tpu.memory_space<vmem>>, vector<8x128xf32>,
    return
  }
  func.func @transform_0(%arg0: i32, %arg1: i32) -> (i32, i32) {
    %c0_i32 = arith.constant 0 : i32
    %c0_i32_0 = arith.constant 0 : i32
    return %arg0, %c0_i32 : i32, i32
  }
  func.func @transform_1(%arg0: i32, %arg1: i32) -> (i32, i32, i32) {
    %c0_i32 = arith.constant 0 : i32
    %c0_i32_0 = arith.constant 0 : i32
    %c0_i32_1 = arith.constant 0 : i32
    return %c0_i32, %c0_i32_0, %arg1 : i32, i32, i32
  }
  func.func @transform_2(%arg0: i32, %arg1: i32) -> (i32, i32, i32) {
    %c0_i32 = arith.constant 0 : i32
    %c0_i32_0 = arith.constant 0 : i32
    %c0_i32_1 = arith.constant 0 : i32
    return %c0_i32, %c0_i32_0, %arg1 : i32, i32, i32
  }
  func.func @transform_3(%arg0: i32, %arg1: i32) -> (i32, i32) {
    %c0_i32 = arith.constant 0 : i32
    return %arg0, %arg1 : i32, i32
  }
}

</mosaic_0001>

<llo_original>
// kernel: maxout_pallas.1
$region0: #{maxout_pallas.1}
  #allocation0 [shape = 'u32[]', space=smem, size = 0x4, offset = 0x4, fixed_abs, tag = 'smem constant byte address 0x4 - core index']
  #allocation1 [shape = 'u32[144,128]{1,0:T(1,128)}', space=vmem, size = 0x12000, scoped, tag = 'internal scratch']
  %s0 = inlined_call_operand.vmem [shape: f32[8,128], index: 0, kind: input, shape index: {}]
  %s1 = inlined_call_operand.hbm [shape: f32[4,128,128], index: 1, kind: input, shape index: {}]
  %s2 = inlined_call_operand.vmem [shape: f32[4,1,128], index: 2, kind: input, shape index: {}]
  %s3 = inlined_call_operand.hbm [shape: f32[8,128], index: 3, kind: output, shape index: {}]
  %s4 = sld [smem:[#allocation0]]
  $region26: #{maxout_pallas.1} parent=0
    _
  %s6 = ssub.s32 1, %s4
  %s7 = scalar_select 0, %s6, %s4
  $region1: #{maxout_pallas.1} parent=0
    #allocation2 [shape = 'u8[262144]{0}', space=vmem, size = 0x40000, scoped, tag = 'input window, operand 1, single buffered']
    #allocation3 [shape = 's32[1]{0}', space=sflag, size = 0x4, scoped, tag = 'scoped memory for maxout_pallas.1']
    #allocation4 [shape = 's32[1]{0}', space=sflag, size = 0x4, scoped, tag = 'scoped memory for maxout_pallas.1']
    #allocation5 [shape = 'u8[4096]{0}', space=vmem, size = 0x1000, scoped, tag = 'output window, operand 0, single buffered']
    %8 = vsyncpa [#allocation3], 0
    %9 = vsyncpa [#allocation4], 0
    // Predicated region
    $region2: #{maxout_pallas.1} parent=1 // pred_check
      _
    $region3: #{maxout_pallas.1} parent=1 // pred_check_branch
      %11 = sbr.rel (0) target = $region5
    $region4: #{maxout_pallas.1} parent=1 // pred_region
      _
    $region5: #{maxout_pallas.1} parent=1 // pred_fallthru
      _
    // Predicated region
    $region6: #{maxout_pallas.1} parent=1 // pred_check
      _
    $region7: #{maxout_pallas.1} parent=1 // pred_check_branch
      %13 = sbr.rel (0) target = $region9
    $region8: #{maxout_pallas.1} parent=1 // pred_region
      %s15 = ssub.s32 8192, 8192
      %16 = vsyncadd [#allocation3], %s15
      %s17 = sshll.u32 [#allocation2], 4
      %s18 = int_to_ptr.vmem [resolvable:$true] %s17
      %23 = dma.hbm_to_vmem [thread:$0]  %s1, 8192, %s18, [#allocation3], 128, 128, 8
    $region9: #{maxout_pallas.1} parent=1 // pred_fallthru
      _
    // Predicated region
    $region10: #{maxout_pallas.1} parent=1 // pred_check
      _
    $region11: #{maxout_pallas.1} parent=1 // pred_check_branch
      %25 = sbr.rel (0) target = $region13
    $region12: #{maxout_pallas.1} parent=1 // pred_region
      _
    $region13: #{maxout_pallas.1} parent=1 // pred_fallthru
      _
    // Predicated region
    $region14: #{maxout_pallas.1} parent=1 // pred_check
      _
    $region15: #{maxout_pallas.1} parent=1 // pred_check_branch
      %27 = sbr.rel (0) target = $region17
    $region16: #{maxout_pallas.1} parent=1 // pred_region
      %28 = dma.done [#allocation3], 8192
    $region17: #{maxout_pallas.1} parent=1 // pred_fallthru
      _
    %v29 = vld [vmem:[%s0] sm:$0xff]
    %v30 = vld [vmem:[#allocation2] sm:$0xff]
    %v31 = vld [vmem:[#allocation2 + $0x8] sm:$0xff]
    %v32 = vld [vmem:[#allocation2 + $0x10] sm:$0xff]
    %v33 = vld [vmem:[#allocation2 + $0x18] sm:$0xff]
    %v34 = vld [vmem:[#allocation2 + $0x20] sm:$0xff]
    %v35 = vld [vmem:[#allocation2 + $0x28] sm:$0xff]
    %v36 = vld [vmem:[#allocation2 + $0x30] sm:$0xff]
    %v37 = vld [vmem:[#allocation2 + $0x38] sm:$0xff]
    %v38 = vld [vmem:[#allocation2 + $0x40] sm:$0xff]
    %v39 = vld [vmem:[#allocation2 + $0x48] sm:$0xff]
    %v40 = vld [vmem:[#allocation2 + $0x50] sm:$0xff]
    %v41 = vld [vmem:[#allocation2 + $0x58] sm:$0xff]
    %v42 = vld [vmem:[#allocation2 + $0x60] sm:$0xff]
    %v43 = vld [vmem:[#allocation2 + $0x68] sm:$0xff]
    %v44 = vld [vmem:[#allocation2 + $0x70] sm:$0xff]
    %v45 = vld [vmem:[#allocation2 + $0x78] sm:$0xff]
    %v46 = vld [vmem:[%s2] sm:$0x1]
    %v48 = vlaneseq
    %v49 = vshrl.u32 %v48, 7
    %v50 = vsub.s32 0, %v49
    %v51 = vrot.slane %v46, %v50
    %53 = vmatprep.subr.mxu0 0.0
    %54 = vmatpush1.msra.mxu0 %v30
    %55 = vmatprep.subr.mxu0 0.0
    %56 = vmatpush1.msra.mxu0 %v31
    %57 = vmatprep.subr.mxu0 0.0
    %58 = vmatpush1.msra.mxu0 %v32
    %59 = vmatprep.subr.mxu0 0.0
    %60 = vmatpush1.msra.mxu0 %v33
    %61 = vmatprep.subr.mxu0 0.0
    %62 = vmatpush1.msra.mxu0 %v34
    %63 = vmatprep.subr.mxu0 0.0
    %64 = vmatpush1.msra.mxu0 %v35
    %65 = vmatprep.subr.mxu0 0.0
    %66 = vmatpush1.msra.mxu0 %v36
    %67 = vmatprep.subr.mxu0 0.0
    %68 = vmatpush1.msra.mxu0 %v37
    %69 = vmatprep.subr.mxu0 0.0
    %70 = vmatpush1.msra.mxu0 %v38
    %71 = vmatprep.subr.mxu0 0.0
    %72 = vmatpush1.msra.mxu0 %v39
    %73 = vmatprep.subr.mxu0 0.0
    %74 = vmatpush1.msra.mxu0 %v40
    %75 = vmatprep.subr.mxu0 0.0
    %76 = vmatpush1.msra.mxu0 %v41
    %77 = vmatprep.subr.mxu0 0.0
    %78 = vmatpush1.msra.mxu0 %v42
    %79 = vmatprep.subr.mxu0 0.0
    %80 = vmatpush1.msra.mxu0 %v43
    %81 = vmatprep.subr.mxu0 0.0
    %82 = vmatpush1.msra.mxu0 %v44
    %83 = vmatprep.subr.mxu0 0.0
    %84 = vmatpush1.msra.mxu0 %v45
    %85 = vmatprep.subr.mxu0 0.0
    %86 = vmatpush1.msra.mxu0 0.0
    %87 = vmatprep.subr.mxu0 0.0
    %88 = vmatpush1.msra.mxu0 0.0
    %89 = vmatprep.subr.mxu0 0.0
    %90 = vmatpush1.msra.mxu0 0.0
    %91 = vmatprep.subr.mxu0 0.0
    %92 = vmatpush1.msra.mxu0 0.0
    %93 = vmatprep.subr.mxu0 0.0
    %94 = vmatpush1.msra.mxu0 0.0
    %95 = vmatprep.subr.mxu0 0.0
    %96 = vmatpush1.msra.mxu0 0.0
    %97 = vmatprep.subr.mxu0 0.0
    %98 = vmatpush1.msra.mxu0 0.0
    %99 = vmatprep.subr.mxu0 0.0
    %100 = vmatpush1.msra.mxu0 0.0
    %101 = vmatprep.subr.mxu0 0.0
    %102 = vmatpush1.msra.mxu0 0.0
    %103 = vmatprep.subr.mxu0 0.0
    %104 = vmatpush1.msra.mxu0 0.0
    %105 = vmatprep.subr.mxu0 0.0
    %106 = vmatpush1.msra.mxu0 0.0
    %107 = vmatprep.subr.mxu0 0.0
    %108 = vmatpush1.msra.mxu0 0.0
    %109 = vmatprep.subr.mxu0 0.0
    %110 = vmatpush1.msra.mxu0 0.0
    %111 = vmatprep.subr.mxu0 0.0
    %112 = vmatpush1.msra.mxu0 0.0
    %113 = vmatprep.subr.mxu0 0.0
    %114 = vmatpush1.msra.mxu0 0.0
    %115 = vmatprep.subr.mxu0 0.0
    %116 = vmatpush1.msra.mxu0 0.0
    %117 = vmatprep.mubr.f32.mxu0 0.0
    %118 = vmatmul.mubr.f32.gmra.mrb[0].mxu0 %v29
    %v119 = vpop.f32.mrb[0].mxu0
    %v120 = vadd.f32 %v51, %v119
    %v121 = vpop.f32.mrb[0].mxu0
    %122 = vdwg.mxu0
    %s123 = scalar_lea.vmem [#allocation2], 128
    %v124 = vld [vmem:[%s123] sm:$0xff]
    %v125 = vld [vmem:[%s123 + $0x8] sm:$0xff]
    %v126 = vld [vmem:[%s123 + $0x10] sm:$0xff]
    %v127 = vld [vmem:[%s123 + $0x18] sm:$0xff]
    %v128 = vld [vmem:[%s123 + $0x20] sm:$0xff]
    %v129 = vld [vmem:[%s123 + $0x28] sm:$0xff]
    %v130 = vld [vmem:[%s123 + $0x30] sm:$0xff]
    %v131 = vld [vmem:[%s123 + $0x38] sm:$0xff]
    %v132 = vld [vmem:[%s123 + $0x40] sm:$0xff]
    %v133 = vld [vmem:[%s123 + $0x48] sm:$0xff]
    %v134 = vld [vmem:[%s123 + $0x50] sm:$0xff]
    %v135 = vld [vmem:[%s123 + $0x58] sm:$0xff]
    %v136 = vld [vmem:[%s123 + $0x60] sm:$0xff]
    %v137 = vld [vmem:[%s123 + $0x68] sm:$0xff]
    %v138 = vld [vmem:[%s123 + $0x70] sm:$0xff]
    %v139 = vld [vmem:[%s123 + $0x78] sm:$0xff]
    %s140 = scalar_lea.vmem %s2, 1
    %v141 = vld [vmem:[%s140] sm:$0x1]
    %v143 = vlaneseq
    %v144 = vshrl.u32 %v143, 7
    %v145 = vsub.s32 0, %v144
    %v146 = vrot.slane %v141, %v145
    %148 = vmatprep.subr.mxu0 0.0
    %149 = vmatpush1.msra.mxu0 %v124
    %150 = vmatprep.subr.mxu0 0.0
    %151 = vmatpush1.msra.mxu0 %v125
    %152 = vmatprep.subr.mxu0 0.0
    %153 = vmatpush1.msra.mxu0 %v126
    %154 = vmatprep.subr.mxu0 0.0
    %155 = vmatpush1.msra.mxu0 %v127
    %156 = vmatprep.subr.mxu0 0.0
    %157 = vmatpush1.msra.mxu0 %v128
    %158 = vmatprep.subr.mxu0 0.0
    %159 = vmatpush1.msra.mxu0 %v129
    %160 = vmatprep.subr.mxu0 0.0
    %161 = vmatpush1.msra.mxu0 %v130
    %162 = vmatprep.subr.mxu0 0.0
    %163 = vmatpush1.msra.mxu0 %v131
    %164 = vmatprep.subr.mxu0 0.0
    %165 = vmatpush1.msra.mxu0 %v132
    %166 = vmatprep.subr.mxu0 0.0
    %167 = vmatpush1.msra.mxu0 %v133
    %168 = vmatprep.subr.mxu0 0.0
    %169 = vmatpush1.msra.mxu0 %v134
    %170 = vmatprep.subr.mxu0 0.0
    %171 = vmatpush1.msra.mxu0 %v135
    %172 = vmatprep.subr.mxu0 0.0
    %173 = vmatpush1.msra.mxu0 %v136
    %174 = vmatprep.subr.mxu0 0.0
    %175 = vmatpush1.msra.mxu0 %v137
    %176 = vmatprep.subr.mxu0 0.0
    %177 = vmatpush1.msra.mxu0 %v138
    %178 = vmatprep.subr.mxu0 0.0
    %179 = vmatpush1.msra.mxu0 %v139
    %180 = vmatprep.subr.mxu0 0.0
    %181 = vmatpush1.msra.mxu0 0.0
    %182 = vmatprep.subr.mxu0 0.0
    %183 = vmatpush1.msra.mxu0 0.0
    %184 = vmatprep.subr.mxu0 0.0
    %185 = vmatpush1.msra.mxu0 0.0
    %186 = vmatprep.subr.mxu0 0.0
    %187 = vmatpush1.msra.mxu0 0.0
    %188 = vmatprep.subr.mxu0 0.0
    %189 = vmatpush1.msra.mxu0 0.0
    %190 = vmatprep.subr.mxu0 0.0
    %191 = vmatpush1.msra.mxu0 0.0
    %192 = vmatprep.subr.mxu0 0.0
    %193 = vmatpush1.msra.mxu0 0.0
    %194 = vmatprep.subr.mxu0 0.0
    %195 = vmatpush1.msra.mxu0 0.0
    %196 = vmatprep.subr.mxu0 0.0
    %197 = vmatpush1.msra.mxu0 0.0
    %198 = vmatprep.subr.mxu0 0.0
    %199 = vmatpush1.msra.mxu0 0.0
    %200 = vmatprep.subr.mxu0 0.0
    %201 = vmatpush1.msra.mxu0 0.0
    %202 = vmatprep.subr.mxu0 0.0
    %203 = vmatpush1.msra.mxu0 0.0
    %204 = vmatprep.subr.mxu0 0.0
    %205 = vmatpush1.msra.mxu0 0.0
    %206 = vmatprep.subr.mxu0 0.0
    %207 = vmatpush1.msra.mxu0 0.0
    %208 = vmatprep.subr.mxu0 0.0
    %209 = vmatpush1.msra.mxu0 0.0
    %210 = vmatprep.subr.mxu0 0.0
    %211 = vmatpush1.msra.mxu0 0.0
    %212 = vmatprep.mubr.f32.mxu0 0.0
    %213 = vmatmul.mubr.f32.gmra.mrb[0].mxu0 %v29
    %v214 = vpop.f32.mrb[0].mxu0
    %v215 = vadd.f32 %v146, %v214
    %v216 = vpop.f32.mrb[0].mxu0
    %217 = vdwg.mxu0
    %v218 = vmax.f32 %v120, %v215
    %s219 = scalar_lea.vmem [#allocation2], 256
    %v220 = vld [vmem:[%s219] sm:$0xff]
    %v221 = vld [vmem:[%s219 + $0x8] sm:$0xff]
    %v222 = vld [vmem:[%s219 + $0x10] sm:$0xff]
    %v223 = vld [vmem:[%s219 + $0x18] sm:$0xff]
    %v224 = vld [vmem:[%s219 + $0x20] sm:$0xff]
    %v225 = vld [vmem:[%s219 + $0x28] sm:$0xff]
    %v226 = vld [vmem:[%s219 + $0x30] sm:$0xff]
    %v227 = vld [vmem:[%s219 + $0x38] sm:$0xff]
    %v228 = vld [vmem:[%s219 + $0x40] sm:$0xff]
    %v229 = vld [vmem:[%s219 + $0x48] sm:$0xff]
    %v230 = vld [vmem:[%s219 + $0x50] sm:$0xff]
    %v231 = vld [vmem:[%s219 + $0x58] sm:$0xff]
    %v232 = vld [vmem:[%s219 + $0x60] sm:$0xff]
    %v233 = vld [vmem:[%s219 + $0x68] sm:$0xff]
    %v234 = vld [vmem:[%s219 + $0x70] sm:$0xff]
    %v235 = vld [vmem:[%s219 + $0x78] sm:$0xff]
    %s236 = scalar_lea.vmem %s2, 2
    %v237 = vld [vmem:[%s236] sm:$0x1]
    %v239 = vlaneseq
    %v240 = vshrl.u32 %v239, 7
    %v241 = vsub.s32 0, %v240
    %v242 = vrot.slane %v237, %v241
    %244 = vmatprep.subr.mxu0 0.0
    %245 = vmatpush1.msra.mxu0 %v220
    %246 = vmatprep.subr.mxu0 0.0
    %247 = vmatpush1.msra.mxu0 %v221
    %248 = vmatprep.subr.mxu0 0.0
    %249 = vmatpush1.msra.mxu0 %v222
    %250 = vmatprep.subr.mxu0 0.0
    %251 = vmatpush1.msra.mxu0 %v223
    %252 = vmatprep.subr.mxu0 0.0
    %253 = vmatpush1.msra.mxu0 %v224
    %254 = vmatprep.subr.mxu0 0.0
    %255 = vmatpush1.msra.mxu0 %v225
    %256 = vmatprep.subr.mxu0 0.0
    %257 = vmatpush1.msra.mxu0 %v226
    %258 = vmatprep.subr.mxu0 0.0
    %259 = vmatpush1.msra.mxu0 %v227
    %260 = vmatprep.subr.mxu0 0.0
    %261 = vmatpush1.msra.mxu0 %v228
    %262 = vmatprep.subr.mxu0 0.0
    %263 = vmatpush1.msra.mxu0 %v229
    %264 = vmatprep.subr.mxu0 0.0
    %265 = vmatpush1.msra.mxu0 %v230
    %266 = vmatprep.subr.mxu0 0.0
    %267 = vmatpush1.msra.mxu0 %v231
    %268 = vmatprep.subr.mxu0 0.0
    %269 = vmatpush1.msra.mxu0 %v232
    %270 = vmatprep.subr.mxu0 0.0
    %271 = vmatpush1.msra.mxu0 %v233
    %272 = vmatprep.subr.mxu0 0.0
    %273 = vmatpush1.msra.mxu0 %v234
    %274 = vmatprep.subr.mxu0 0.0
    %275 = vmatpush1.msra.mxu0 %v235
    %276 = vmatprep.subr.mxu0 0.0
    %277 = vmatpush1.msra.mxu0 0.0
    %278 = vmatprep.subr.mxu0 0.0
    %279 = vmatpush1.msra.mxu0 0.0
    %280 = vmatprep.subr.mxu0 0.0
    %281 = vmatpush1.msra.mxu0 0.0
    %282 = vmatprep.subr.mxu0 0.0
    %283 = vmatpush1.msra.mxu0 0.0
    %284 = vmatprep.subr.mxu0 0.0
    %285 = vmatpush1.msra.mxu0 0.0
    %286 = vmatprep.subr.mxu0 0.0
    %287 = vmatpush1.msra.mxu0 0.0
    %288 = vmatprep.subr.mxu0 0.0
    %289 = vmatpush1.msra.mxu0 0.0
    %290 = vmatprep.subr.mxu0 0.0
    %291 = vmatpush1.msra.mxu0 0.0
    %292 = vmatprep.subr.mxu0 0.0
    %293 = vmatpush1.msra.mxu0 0.0
    %294 = vmatprep.subr.mxu0 0.0
    %295 = vmatpush1.msra.mxu0 0.0
    %296 = vmatprep.subr.mxu0 0.0
    %297 = vmatpush1.msra.mxu0 0.0
    %298 = vmatprep.subr.mxu0 0.0
    %299 = vmatpush1.msra.mxu0 0.0
    %300 = vmatprep.subr.mxu0 0.0
    %301 = vmatpush1.msra.mxu0 0.0
    %302 = vmatprep.subr.mxu0 0.0
    %303 = vmatpush1.msra.mxu0 0.0
    %304 = vmatprep.subr.mxu0 0.0
    %305 = vmatpush1.msra.mxu0 0.0
    %306 = vmatprep.subr.mxu0 0.0
    %307 = vmatpush1.msra.mxu0 0.0
    %308 = vmatprep.mubr.f32.mxu0 0.0
    %309 = vmatmul.mubr.f32.gmra.mrb[0].mxu0 %v29
    %v310 = vpop.f32.mrb[0].mxu0
    %v311 = vadd.f32 %v242, %v310
    %v312 = vpop.f32.mrb[0].mxu0
    %313 = vdwg.mxu0
    %v314 = vmax.f32 %v218, %v311
    %s315 = scalar_lea.vmem [#allocation2], 384
    %v316 = vld [vmem:[%s315] sm:$0xff]
    %v317 = vld [vmem:[%s315 + $0x8] sm:$0xff]
    %v318 = vld [vmem:[%s315 + $0x10] sm:$0xff]
    %v319 = vld [vmem:[%s315 + $0x18] sm:$0xff]
    %v320 = vld [vmem:[%s315 + $0x20] sm:$0xff]
    %v321 = vld [vmem:[%s315 + $0x28] sm:$0xff]
    %v322 = vld [vmem:[%s315 + $0x30] sm:$0xff]
    %v323 = vld [vmem:[%s315 + $0x38] sm:$0xff]
    %v324 = vld [vmem:[%s315 + $0x40] sm:$0xff]
    %v325 = vld [vmem:[%s315 + $0x48] sm:$0xff]
    %v326 = vld [vmem:[%s315 + $0x50] sm:$0xff]
    %v327 = vld [vmem:[%s315 + $0x58] sm:$0xff]
    %v328 = vld [vmem:[%s315 + $0x60] sm:$0xff]
    %v329 = vld [vmem:[%s315 + $0x68] sm:$0xff]
    %v330 = vld [vmem:[%s315 + $0x70] sm:$0xff]
    %v331 = vld [vmem:[%s315 + $0x78] sm:$0xff]
    %s332 = scalar_lea.vmem %s2, 3
    %v333 = vld [vmem:[%s332] sm:$0x1]
    %v335 = vlaneseq
    %v336 = vshrl.u32 %v335, 7
    %v337 = vsub.s32 0, %v336
    %v338 = vrot.slane %v333, %v337
    %340 = vmatprep.subr.mxu0 0.0
    %341 = vmatpush1.msra.mxu0 %v316
    %342 = vmatprep.subr.mxu0 0.0
    %343 = vmatpush1.msra.mxu0 %v317
    %344 = vmatprep.subr.mxu0 0.0
    %345 = vmatpush1.msra.mxu0 %v318
    %346 = vmatprep.subr.mxu0 0.0
    %347 = vmatpush1.msra.mxu0 %v319
    %348 = vmatprep.subr.mxu0 0.0
    %349 = vmatpush1.msra.mxu0 %v320
    %350 = vmatprep.subr.mxu0 0.0
    %351 = vmatpush1.msra.mxu0 %v321
    %352 = vmatprep.subr.mxu0 0.0
    %353 = vmatpush1.msra.mxu0 %v322
    %354 = vmatprep.subr.mxu0 0.0
    %355 = vmatpush1.msra.mxu0 %v323
    %356 = vmatprep.subr.mxu0 0.0
    %357 = vmatpush1.msra.mxu0 %v324
    %358 = vmatprep.subr.mxu0 0.0
    %359 = vmatpush1.msra.mxu0 %v325
    %360 = vmatprep.subr.mxu0 0.0
    %361 = vmatpush1.msra.mxu0 %v326
    %362 = vmatprep.subr.mxu0 0.0
    %363 = vmatpush1.msra.mxu0 %v327
    %364 = vmatprep.subr.mxu0 0.0
    %365 = vmatpush1.msra.mxu0 %v328
    %366 = vmatprep.subr.mxu0 0.0
    %367 = vmatpush1.msra.mxu0 %v329
    %368 = vmatprep.subr.mxu0 0.0
    %369 = vmatpush1.msra.mxu0 %v330
    %370 = vmatprep.subr.mxu0 0.0
    %371 = vmatpush1.msra.mxu0 %v331
    %372 = vmatprep.subr.mxu0 0.0
    %373 = vmatpush1.msra.mxu0 0.0
    %374 = vmatprep.subr.mxu0 0.0
    %375 = vmatpush1.msra.mxu0 0.0
    %376 = vmatprep.subr.mxu0 0.0
    %377 = vmatpush1.msra.mxu0 0.0
    %378 = vmatprep.subr.mxu0 0.0
    %379 = vmatpush1.msra.mxu0 0.0
    %380 = vmatprep.subr.mxu0 0.0
    %381 = vmatpush1.msra.mxu0 0.0
    %382 = vmatprep.subr.mxu0 0.0
    %383 = vmatpush1.msra.mxu0 0.0
    %384 = vmatprep.subr.mxu0 0.0
    %385 = vmatpush1.msra.mxu0 0.0
    %386 = vmatprep.subr.mxu0 0.0
    %387 = vmatpush1.msra.mxu0 0.0
    %388 = vmatprep.subr.mxu0 0.0
    %389 = vmatpush1.msra.mxu0 0.0
    %390 = vmatprep.subr.mxu0 0.0
    %391 = vmatpush1.msra.mxu0 0.0
    %392 = vmatprep.subr.mxu0 0.0
    %393 = vmatpush1.msra.mxu0 0.0
    %394 = vmatprep.subr.mxu0 0.0
    %395 = vmatpush1.msra.mxu0 0.0
    %396 = vmatprep.subr.mxu0 0.0
    %397 = vmatpush1.msra.mxu0 0.0
    %398 = vmatprep.subr.mxu0 0.0
    %399 = vmatpush1.msra.mxu0 0.0
    %400 = vmatprep.subr.mxu0 0.0
    %401 = vmatpush1.msra.mxu0 0.0
    %402 = vmatprep.subr.mxu0 0.0
    %403 = vmatpush1.msra.mxu0 0.0
    %404 = vmatprep.mubr.f32.mxu0 0.0
    %405 = vmatmul.mubr.f32.gmra.mrb[0].mxu0 %v29
    %v406 = vpop.f32.mrb[0].mxu0
    %v407 = vadd.f32 %v338, %v406
    %v408 = vpop.f32.mrb[0].mxu0
    %409 = vdwg.mxu0
    %v410 = vmax.f32 %v314, %v407
    %411 = vst [vmem:[#allocation5] sm:$0xff] %v410
    // Predicated region
    $region18: #{maxout_pallas.1} parent=1 // pred_check
      _
    $region19: #{maxout_pallas.1} parent=1 // pred_check_branch
      %413 = sbr.rel (0) target = $region21
    $region20: #{maxout_pallas.1} parent=1 // pred_region
      %s415 = ssub.s32 128, 128
      %416 = vsyncadd [#allocation4], %s415
      %s418 = sshll.u32 [#allocation5], 4
      %s419 = int_to_ptr.vmem [resolvable:$true] %s418
      %421 = dma.vmem_to_hbm [thread:$0]  %s419, 128, %s3, [#allocation4]
    $region21: #{maxout_pallas.1} parent=1 // pred_fallthru
      _
    // Predicated region
    $region22: #{maxout_pallas.1} parent=1 // pred_check
      _
    $region23: #{maxout_pallas.1} parent=1 // pred_check_branch
      %423 = sbr.rel (0) target = $region25
    $region24: #{maxout_pallas.1} parent=1 // pred_region
      %424 = dma.done [#allocation4], 128
    $region25: #{maxout_pallas.1} parent=1 // pred_fallthru
      _
    %425 = vsyncpa [#allocation3], 1
    %426 = vsyncpa [#allocation4], 1

</llo_original>
